<compile_context>
chip_gen: v5e
topology: v5e:2x2
jax: 0.10.0
libtpu: 0.0.40
codegen_flags: <defaults>
</compile_context>

<pallas_src>
import math

import numpy as np
import jax
import jax.numpy as jnp
from jax.experimental import pallas as pl
from jax.experimental.pallas import tpu as pltpu

_EPS = 1e-12          # matches torch.nn.functional.normalize default eps
_MAX_ROW_TILE = 1024  # rows per block; ~roofline saturates by 512-1024


# ----------------------------------------------------------------------------
# Hardware plan (VMEM budget / limit, TensorCore count)
# ----------------------------------------------------------------------------
def _vmem_plan():
    physical = 64 << 20   # conservative default == v7x per-core physical VMEM
    cores = 1
    try:
        info = pltpu.get_tpu_info()
        physical = int(getattr(info, "vmem_capacity_bytes", physical))
    except Exception:
        pass
    try:
        kind = jax.devices()[0].device_kind.lower()
        if "v7" in kind or "7x" in kind:
            cores = 2
    except Exception:
        pass
    # Budget for the resident block buffers; limit is what we hand to Mosaic.
    budget = min(physical // 3, 36 << 20)            # 36 MiB v5e/v6e, ~21 MiB v7x
    limit = min(physical // 2, budget + (24 << 20))  # 60 MiB v5e/v6e, 32 MiB v7x
    return budget, limit, cores


def _round_up(v, m):
    return -(-v // m) * m


def _sublane(dtype):
    # Packed sublane multiple: 8 for 32-bit, 16 for 16-bit, 32 for 8-bit.
    return max(8, 32 // jnp.dtype(dtype).itemsize)


def _pick_row_tile(rows, feat, dtype, budget, cores):
    itemsize = jnp.dtype(dtype).itemsize
    sub = _sublane(dtype)
    # 2x double-buffered input + 2x output block copies, plus ~2 f32 rows of
    # in-kernel temporaries (the f32 cast for the reduction and x*x).
    bytes_per_row = 4 * feat * itemsize + 8 * feat
    tile = budget // max(bytes_per_row, 1)
    tile = int(min(tile, _MAX_ROW_TILE))
    tile = max(sub, (tile // sub) * sub)
    if cores >= 2 and rows > 4 * sub:
        # v7x megacore only: keep >= 4 grid steps (>= 2 per TensorCore) so each
        # core still overlaps DMA with compute. Single-TC chips keep max tile.
        quarter = _round_up(_round_up(rows, 4) // 4, sub)
        tile = max(sub, min(tile, quarter))
    tile = min(tile, _round_up(rows, sub))
    return max(sub, tile)


# ----------------------------------------------------------------------------
# Kernels
# ----------------------------------------------------------------------------
def _l2_last_kernel(x_ref, o_ref):
    # x_ref / o_ref: (row_tile, feat); normalize each row over the lane axis.
    x = x_ref[...]
    xf = x.astype(jnp.float32)                           # f32 accumulation
    sumsq = jnp.sum(xf * xf, axis=-1, keepdims=True)     # (row_tile, 1)
    inv = jax.lax.rsqrt(jnp.maximum(sumsq, _EPS * _EPS)) # == 1/max(||x||, eps)
    # Broadcast multiply in the *input* dtype: no full f32 tile materialized.
    o_ref[...] = (x * inv.astype(x.dtype)).astype(o_ref.dtype)


def _l2_folded_kernel(x_ref, seg_ref, o_ref):
    # x_ref: (row_tile, 128) -- G = 128//feat logical rows folded per lane-row.
    # seg_ref: (128, 128) block-diagonal 0/1 matrix (same-group indicator).
    x = x_ref[...]
    xf = x.astype(jnp.float32)
    # Per-lane segmented sum of squares over each group of `feat` lanes via a
    # tiny MXU matmul; keeps every load/store fully lane-dense.
    sumsq = jnp.dot(xf * xf, seg_ref[...],
                    precision=jax.lax.Precision.HIGHEST,
                    preferred_element_type=jnp.float32)   # (row_tile, 128)
    inv = jax.lax.rsqrt(jnp.maximum(sumsq, _EPS * _EPS))
    o_ref[...] = (x * inv.astype(x.dtype)).astype(o_ref.dtype)


def _l2_mid_kernel(x_ref, o_ref):
    # x_ref / o_ref: (1, N, lane_tile); normalize over the resident middle axis
    # (sublane reduce) -- no transposes needed for dim != -1.
    x = x_ref[...]
    xf = x.astype(jnp.float32)
    sumsq = jnp.sum(xf * xf, axis=1, keepdims=True)       # (1, 1, lane_tile)
    inv = jax.lax.rsqrt(jnp.maximum(sumsq, _EPS * _EPS))
    o_ref[...] = (x * inv.astype(x.dtype)).astype(o_ref.dtype)


# ----------------------------------------------------------------------------
# pallas_call wrappers
# ----------------------------------------------------------------------------
def _run_last(x2d, row_tile, vmem_limit, seg=None):
    rows, feat = x2d.shape
    grid = (pl.cdiv(rows, row_tile),)
    x_spec = pl.BlockSpec((row_tile, feat), lambda i: (i, 0))
    o_spec = pl.BlockSpec((row_tile, feat), lambda i: (i, 0))
    cp = pltpu.CompilerParams(dimension_semantics=("parallel",),
                              vmem_limit_bytes=int(vmem_limit))
    if seg is None:
        return pl.pallas_call(
            _l2_last_kernel,
            out_shape=jax.ShapeDtypeStruct((rows, feat), x2d.dtype),
            grid_spec=pltpu.PrefetchScalarGridSpec(
                num_scalar_prefetch=0, grid=grid,
                in_specs=[x_spec], out_specs=o_spec),
            compiler_params=cp,
        )(x2d)
    # Segment matrix block index never changes, so it is fetched once.
    seg_spec = pl.BlockSpec(seg.shape, lambda i: (0, 0))
    return pl.pallas_call(
        _l2_folded_kernel,
        out_shape=jax.ShapeDtypeStruct((rows, feat), x2d.dtype),
        grid_spec=pltpu.PrefetchScalarGridSpec(
            num_scalar_prefetch=0, grid=grid,
            in_specs=[x_spec, seg_spec], out_specs=o_spec),
        compiler_params=cp,
    )(x2d, seg)


def _seg_matrix(feat, group):
    idx = np.arange(group * feat) // feat
    return jnp.asarray((idx[:, None] == idx[None, :]).astype(np.float32))


def _normalize_last(x):
    feat = x.shape[-1]
    lead_shape = x.shape[:-1]
    rows = math.prod(lead_shape) if lead_shape else 1
    x2d = x.reshape(rows, feat)                 # contiguous: free reinterpretation
    budget, limit, cores = _vmem_plan()

    if feat < 128 and 128 % feat == 0:
        # Lane-dense path for small feature dims: fold G rows per 128-lane row.
        group = 128 // feat
        rows_p = _round_up(rows, group)
        xp = x2d if rows_p == rows else jnp.pad(x2d, ((0, rows_p - rows), (0, 0)))
        xf = xp.reshape(rows_p // group, group * feat)   # free (contiguous)
        row_tile = _pick_row_tile(rows_p // group, group * feat, x.dtype,
                                  budget, cores)
        out = _run_last(xf, row_tile, limit, seg=_seg_matrix(feat, group))
        out = out.reshape(rows_p, feat)[:rows]
    else:
        # TODO(synk): feat >= 128 but not a multiple of 128 still masks the
        # last lane tile of every block; fold-or-pad if it ever shows up hot.
        row_tile = _pick_row_tile(rows, feat, x.dtype, budget, cores)
        out = _run_last(x2d, row_tile, limit)
    return out.reshape(x.shape)


def _normalize_mid(x, dim):
    shape = x.shape
    lead = math.prod(shape[:dim]) if dim > 0 else 1
    n = shape[dim]
    trail = math.prod(shape[dim + 1:])
    budget, limit, cores = _vmem_plan()
    itemsize = jnp.dtype(x.dtype).itemsize
    # Per lane-column: 4 block copies of the input dtype + ~2 f32 temp columns.
    bytes_per_col = n * (4 * itemsize + 8)

    if bytes_per_col * min(trail, 128) > budget:
        # Normalized axis too large to keep resident: fall back to moving it
        # last. TODO(synk): two-pass grid reduction to avoid the transposes.
        xt = jnp.moveaxis(x, dim, -1)
        return jnp.moveaxis(_normalize_last(xt), -1, dim)

    if trail <= 128:
        # TODO(synk): trailing product < 128 is lane-underfilled; fold lead
        # rows into the lane axis if this path ever becomes hot.
        tl = trail
    else:
        tl = min(budget // max(bytes_per_col, 1), 4096, trail)
        tl = max(128, (tl // 128) * 128)

    x3d = x.reshape(lead, n, trail)             # contiguous: free reinterpretation
    grid = (lead, pl.cdiv(trail, tl))
    out3d = pl.pallas_call(
        _l2_mid_kernel,
        out_shape=jax.ShapeDtypeStruct((lead, n, trail), x.dtype),
        grid_spec=pltpu.PrefetchScalarGridSpec(
            num_scalar_prefetch=0, grid=grid,
            in_specs=[pl.BlockSpec((1, n, tl), lambda l, t: (l, 0, t))],
            out_specs=pl.BlockSpec((1, n, tl), lambda l, t: (l, 0, t))),
        compiler_params=pltpu.CompilerParams(
            dimension_semantics=("parallel", "parallel"),
            vmem_limit_bytes=int(limit)),
    )(x3d)
    return out3d.reshape(shape)


def normalize(x, dim=-1):
    """JAX/Pallas equivalent of torch.nn.functional.normalize(x, dim=dim, p=2)."""
    if x.size == 0:
        return x
    ndim = x.ndim
    dim = dim % ndim
    if dim == ndim - 1:
        return _normalize_last(x)
    return _normalize_mid(x, dim)


class Normalize:
    """Mirror of the PyTorch module (no parameters)."""

    def __init__(self, dim: int) -> None:
        self.dim = dim

    def __call__(self, x):
        return normalize(x, dim=self.dim)


def _ref_normalize(x, dim=-1):
    xf = x.astype(jnp.float32)
    norm = jnp.sqrt(jnp.sum(xf * xf, axis=dim, keepdims=True))
    return (xf / jnp.maximum(norm, _EPS)).astype(x.dtype)


if __name__ == "__main__":
    key = jax.random.PRNGKey(0)
    k1, k2, k3, k4, k5 = jax.random.split(key, 5)

    mod = Normalize(dim=-1)

    # Hot path: last-dim normalization, feat a multiple of 128.
    x1 = jax.random.normal(k1, (2, 8, 256), dtype=jnp.float32)
    o1 = jax.block_until_ready(mod(x1))
    assert o1.shape == x1.shape and o1.dtype == x1.dtype
    assert jnp.max(jnp.abs(o1 - _ref_normalize(x1, -1))) < 1e-3

    # Small feature dim -> lane-folded kernel (4 rows per 128-lane row).
    x2 = jax.random.normal(k2, (4, 16, 32), dtype=jnp.float32)
    o2 = jax.block_until_ready(normalize(x2, dim=-1))
    assert jnp.max(jnp.abs(o2 - _ref_normalize(x2, -1))) < 1e-3

    # Ragged rows and rows not a multiple of the fold group.
    x3 = jax.random.normal(k3, (3, 37, 16), dtype=jnp.float32)
    o3 = jax.block_until_ready(normalize(x3, dim=-1))
    assert jnp.max(jnp.abs(o3 - _ref_normalize(x3, -1))) < 1e-3

    # Non-trailing dim: normalized axis kept resident, no HBM transposes.
    x4 = jax.random.normal(k4, (2, 16, 8, 24), dtype=jnp.float32)
    o4 = jax.block_until_ready(normalize(x4, dim=1))
    assert jnp.max(jnp.abs(o4 - _ref_normalize(x4, 1))) < 1e-3

    # bf16: norm accumulated in f32, broadcast multiply stays in bf16.
    x5 = jax.random.normal(k5, (2, 8, 256), dtype=jnp.bfloat16)
    o5 = jax.block_until_ready(mod(x5))
    ref5 = _ref_normalize(x5, -1)
    assert o5.dtype == x5.dtype
    assert jnp.max(jnp.abs(o5.astype(jnp.float32)
                           - ref5.astype(jnp.float32))) < 2e-2

    print("KERNEL_OK")
</pallas_src>

<mosaic_0001>
module attributes {stable_mosaic.version = 11 : i64} {
  func.func @_l2_last_kernel(%arg0: i32, %arg1: memref<16x256xf32, #tpu.memory_space<vmem>>, %arg2: memref<16x256xf32, #tpu.memory_space<vmem>>) attributes {dimension_semantics = [#tpu.dimension_semantics<parallel>], iteration_bounds = array<i64: 1>, scalar_prefetch = 0 : i64, scratch_operands = 0 : i64, tpu.core_type = #tpu.core_type<tc>, window_params = [{transform_indices = @transform_0, window_bounds = array<i64: 16, 256>}, {transform_indices = @transform_1, window_bounds = array<i64: 16, 256>}]} {
    %c0 = arith.constant 0 : index
    %c0_0 = arith.constant 0 : index
    %0 = vector.load %arg1[%c0, %c0_0] : memref<16x256xf32, #tpu.memory_space<vmem>>, vector<16x256xf32>
    %1 = arith.mulf %0, %0 : vector<16x256xf32>
    %cst = arith.constant dense<0.000000e+00> : vector<16xf32>
    %2 = vector.multi_reduction <add>, %1, %cst [1] : vector<16x256xf32> to vector<16xf32>
    %3 = vector.shape_cast %2 : vector<16xf32> to vector<16x1xf32>
    %cst_1 = arith.constant 1.000000e-24 : f32
    %4 = vector.broadcast %cst_1 : f32 to vector<16x1xf32>
    %5 = arith.maximumf %3, %4 : vector<16x1xf32>
    %6 = math.rsqrt %5 : vector<16x1xf32>
    %7 = vector.broadcast %6 : vector<16x1xf32> to vector<16x256xf32>
    %8 = arith.mulf %0, %7 : vector<16x256xf32>
    %c0_2 = arith.constant 0 : index
    %c0_3 = arith.constant 0 : index
    %9 = vector.load %arg2[%c0_2, %c0_3] : memref<16x256xf32, #tpu.memory_space<vmem>>, vector<16x256xf32>
    tpu.vector_store %arg2[%c0_2, %c0_3], %8 {strides = array<i32>} : memref<16x256xf32, #tpu.memory_space<vmem>>, vector<16x256xf32>,
    return
  }
  func.func @transform_0(%arg0: i32) -> (i32, i32) {
    %c0_i32 = arith.constant 0 : i32
    %c0_i32_0 = arith.constant 0 : i32
    return %arg0, %c0_i32 : i32, i32
  }
  func.func @transform_1(%arg0: i32) -> (i32, i32) {
    %c0_i32 = arith.constant 0 : i32
    %c0_i32_0 = arith.constant 0 : i32
    return %arg0, %c0_i32 : i32, i32
  }
}

</mosaic_0001>

<llo_original>
// kernel: tpu_custom_call.1
$region0: #{tpu_custom_call.1}
  #allocation0 [shape = 'u32[]', space=smem, size = 0x4, offset = 0x4, fixed_abs, tag = 'smem constant byte address 0x4 - core index']
  #allocation1 [shape = 'u32[72,128]{1,0:T(1,128)}', space=vmem, size = 0x9000, scoped, tag = 'internal scratch']
  %s0 = inlined_call_operand.hbm [shape: f32[16,256], index: 0, kind: input, shape index: {}]
  %s1 = inlined_call_operand.hbm [shape: f32[16,256], index: 1, kind: output, shape index: {}]
  %s2 = sld [smem:[#allocation0]]
  $region18: #{tpu_custom_call.1} parent=0
    _
  %s4 = ssub.s32 1, %s2
  %s5 = scalar_select 0, %s4, %s2
  $region1: #{tpu_custom_call.1} parent=0
    #allocation2 [shape = 'u8[16384]{0}', space=vmem, size = 0x4000, scoped, tag = 'input window, operand 0, single buffered']
    #allocation3 [shape = 's32[1]{0}', space=sflag, size = 0x4, scoped, tag = 'scoped memory for tpu_custom_call.1']
    #allocation4 [shape = 's32[1]{0}', space=sflag, size = 0x4, scoped, tag = 'scoped memory for tpu_custom_call.1']
    #allocation5 [shape = 'u8[16384]{0}', space=vmem, size = 0x4000, scoped, tag = 'output window, operand 0, single buffered']
    %6 = vsyncpa [#allocation3], 0
    %7 = vsyncpa [#allocation4], 0
    // Predicated region
    $region2: #{tpu_custom_call.1} parent=1 // pred_check
      _
    $region3: #{tpu_custom_call.1} parent=1 // pred_check_branch
      %9 = sbr.rel (0) target = $region5
    $region4: #{tpu_custom_call.1} parent=1 // pred_region
      %11 = vsyncadd [#allocation3], 0
      %s12 = sshll.u32 %s0, 4
      %s13 = int_to_ptr.hbm [resolvable:$true] %s12
      %s14 = sshll.u32 [#allocation2], 4
      %s15 = int_to_ptr.vmem [resolvable:$true] %s14
      %20 = dma.hbm_to_vmem [thread:$0]  %s13, 512, %s15, [#allocation3], 256, 256, 16
    $region5: #{tpu_custom_call.1} parent=1 // pred_fallthru
      _
    // Predicated region
    $region6: #{tpu_custom_call.1} parent=1 // pred_check
      _
    $region7: #{tpu_custom_call.1} parent=1 // pred_check_branch
      %22 = sbr.rel (0) target = $region9
    $region8: #{tpu_custom_call.1} parent=1 // pred_region
      %24 = dma.done [#allocation3], 512
    $region9: #{tpu_custom_call.1} parent=1 // pred_fallthru
      _
    %v25 = vld [vmem:[#allocation2] sm:$0xff]
    %v26 = vld [vmem:[#allocation2 + $0x8] sm:$0xff]
    %v27 = vld [vmem:[#allocation2 + $0x10] sm:$0xff]
    %v28 = vld [vmem:[#allocation2 + $0x18] sm:$0xff]
    %v29 = vmul.f32 %v25, %v25
    %v30 = vmul.f32 %v26, %v26
    %v31 = vmul.f32 %v27, %v27
    %v32 = vmul.f32 %v28, %v28
    %v33 = vadd.f32 %v29, %v30
    %34 = vadd.xlane.f32.xlu0 %v33
    %v35 = vpop.xlane.xlu0 %34
    %v36 = vadd.f32 %v31, %v32
    %37 = vadd.xlane.f32.xlu0 %v36
    %v38 = vpop.xlane.xlu0 %37
    %v39 = vmax.f32 %v35, 1e-24
    %v40 = vmax.f32 %v38, 1e-24
    %v41 = vrsqrt.pop %v39
    %v42 = vmul.f32 %v41, %v39
    %v43 = vmul.f32 %v42, %v41
    %v44 = vmul.f32 0.5, %v43
    %v45 = vsub.f32 1.5, %v44
    %v46 = vmul.f32 %v41, %v45
    %vm47 = vweird.f32 %v39
    %vm48 = vweird.f32 %v41
    %vm49 = vmor %vm47, %vm48
    %v50 = vsel %vm49, %v41, %v46
    %v51 = vrsqrt.pop %v40
    %v52 = vmul.f32 %v51, %v40
    %v53 = vmul.f32 %v52, %v51
    %v54 = vmul.f32 0.5, %v53
    %v55 = vsub.f32 1.5, %v54
    %v56 = vmul.f32 %v51, %v55
    %vm57 = vweird.f32 %v40
    %vm58 = vweird.f32 %v51
    %vm59 = vmor %vm57, %vm58
    %v60 = vsel %vm59, %v51, %v56
    %v61 = vmul.f32 %v25, %v50
    %v62 = vmul.f32 %v26, %v50
    %v63 = vmul.f32 %v27, %v60
    %v64 = vmul.f32 %v28, %v60
    %65 = vst [vmem:[#allocation5] sm:$0xff] %v61
    %66 = vst [vmem:[#allocation5 + $0x8] sm:$0xff] %v62
    %67 = vst [vmem:[#allocation5 + $0x10] sm:$0xff] %v63
    %68 = vst [vmem:[#allocation5 + $0x18] sm:$0xff] %v64
    // Predicated region
    $region10: #{tpu_custom_call.1} parent=1 // pred_check
      _
    $region11: #{tpu_custom_call.1} parent=1 // pred_check_branch
      %70 = sbr.rel (0) target = $region13
    $region12: #{tpu_custom_call.1} parent=1 // pred_region
      %72 = vsyncadd [#allocation4], 0
      %s73 = sshll.u32 [#allocation5], 4
      %s74 = int_to_ptr.vmem [resolvable:$true] %s73
      %s75 = sshll.u32 %s1, 4
      %s76 = int_to_ptr.hbm [resolvable:$true] %s75
      %81 = dma.vmem_to_hbm [thread:$0]  %s74, 512, %s76, [#allocation4], 256, 256, 16
    $region13: #{tpu_custom_call.1} parent=1 // pred_fallthru
      _
    // Predicated region
    $region14: #{tpu_custom_call.1} parent=1 // pred_check
      _
    $region15: #{tpu_custom_call.1} parent=1 // pred_check_branch
      %83 = sbr.rel (0) target = $region17
    $region16: #{tpu_custom_call.1} parent=1 // pred_region
      %85 = dma.done [#allocation4], 512
    $region17: #{tpu_custom_call.1} parent=1 // pred_fallthru
      _
    %86 = vsyncpa [#allocation3], 1
    %87 = vsyncpa [#allocation4], 1

</llo_original>
